<compile_context>
chip_gen: v7x
topology: tpu7x:2x2x1
jax: 0.10.0
libtpu: 0.0.40
codegen_flags: <defaults>
</compile_context>

<pallas_src>
import jax
import jax.numpy as jnp
from jax.experimental import pallas as pl
from jax.experimental.pallas import tpu as pltpu


# ---------------------------------------------------------------------------
# Fused MLP kernel (built per (has_action, out_dim) configuration)
# ---------------------------------------------------------------------------
def _make_critic_kernel(has_action, out_dim):
    # Contract the feature axis (last dim) of both operands:
    #   W^T (H, F)  x  X (tb, F)  ->  (H, tb)
    # i.e. the standard "NT" MXU matmul (same pattern as flash-attention QK^T).
    nt_dims = (((1,), (1,)), ((), ()))

    def kernel(*refs):
        if has_action:
            (s_ref, a_ref, w1s_ref, w1a_ref, b1_ref,
             w2_ref, b2_ref, w3_ref, b3_ref, o_ref) = refs
        else:
            (s_ref, w1s_ref, b1_ref,
             w2_ref, b2_ref, w3_ref, b3_ref, o_ref) = refs

        # ---- Layer 1: h1^T = tanh(W1s^T . state^T (+ W1a^T . action^T) + b1) ----
        # In-kernel bf16 cast of the f32 activation stream (VPU work hidden under
        # the DMA); f32 MXU accumulation; torch.cat replaced by two accumulating dots.
        acc = jax.lax.dot_general(
            w1s_ref[...], s_ref[...].astype(jnp.bfloat16),
            dimension_numbers=nt_dims, preferred_element_type=jnp.float32)
        if has_action:
            acc = acc + jax.lax.dot_general(
                w1a_ref[...], a_ref[...].astype(jnp.bfloat16),
                dimension_numbers=nt_dims, preferred_element_type=jnp.float32)
        h1 = jnp.tanh(acc + b1_ref[...])                                 # (H1, tb) f32

        # ---- Layer 2: h2^T = tanh(W2^T . h1^T + b2)   (NN matmul, N = tb) ----
        h2 = jnp.tanh(
            jnp.dot(w2_ref[...], h1.astype(jnp.bfloat16),
                    preferred_element_type=jnp.float32) + b2_ref[...])   # (H2, tb) f32

        # ---- Value head (kept in f32; tiny) ----
        if out_dim == 1:
            # (H2, tb) * (H2, 1) -> sublane reduce: lane-dense (1, tb) result.
            out = jnp.sum(h2 * w3_ref[...], axis=0, keepdims=True) + b3_ref[...]
        else:
            # (out_dim, H2) . (H2, tb) -> (out_dim, tb), f32 MXU.
            out = jnp.dot(w3_ref[...], h2,
                          preferred_element_type=jnp.float32) + b3_ref[...]
        o_ref[...] = out.astype(o_ref.dtype)

    return kernel


# ---------------------------------------------------------------------------
# Tiling / VMEM helpers
# ---------------------------------------------------------------------------
def _choose_tile(batch, tile_batch):
    """Batch tile: lane-dense (multiple of 128) and, when the batch allows it,
    >=4 grid steps (>=2 for smaller batches) so both v7x TensorCores stay busy
    and each core's double-buffered pipeline is fed."""
    if batch <= 128:
        return batch                      # single full-batch block (== full dim)
    tb = max(128, (min(tile_batch, batch) // 128) * 128)
    for min_tiles in (4, 2):
        if batch >= min_tiles * 128:
            tb = min(tb, max(128, (pl.cdiv(batch, min_tiles) // 128) * 128))
            break
    return tb


def _vmem_bytes_estimate(tb, in_dim, h1, h2, out_dim):
    """Generous per-core VMEM footprint estimate for the pipelined kernel."""
    f32, bf16 = 4, 2
    stream = 2 * tb * in_dim * f32 + 2 * out_dim * tb * f32        # double-buffered I/O
    resident = 2 * (h1 * in_dim * bf16 + h2 * h1 * bf16            # resident weights
                    + (h1 + h2 + out_dim) * f32 + h2 * out_dim * f32)
    scratch = tb * in_dim * bf16 + tb * (h1 + h2) * (f32 + bf16)   # casts + h1/h2
    return stream + resident + scratch


# ---------------------------------------------------------------------------
# One-time parameter preparation (hoisted out of the per-step forward)
# ---------------------------------------------------------------------------
def prepare_params(params, state_dim, action_dim=None):
    """Convert PyTorch-layout params (W: (out, in), b: (out,)) into the kernel's
    resident-weight layout.  Call once; reuse the result every forward step."""
    w1, b1 = params["w1"], params["b1"]
    w2, b2 = params["w2"], params["b2"]
    w3, b3 = params["w3"], params["b3"]
    out_dim = w3.shape[0]
    prep = {
        "w1s_t": jnp.asarray(w1[:, :state_dim], jnp.bfloat16),        # (H1, S)
        "b1": jnp.asarray(b1, jnp.float32).reshape(-1, 1),            # (H1, 1)
        "w2_t": jnp.asarray(w2, jnp.bfloat16),                        # (H2, H1)
        "b2": jnp.asarray(b2, jnp.float32).reshape(-1, 1),            # (H2, 1)
        "b3": jnp.asarray(b3, jnp.float32).reshape(-1, 1),            # (out, 1)
    }
    if action_dim is not None:
        prep["w1a_t"] = jnp.asarray(
            w1[:, state_dim:state_dim + action_dim], jnp.bfloat16)    # (H1, A)
    if out_dim == 1:
        prep["w3"] = jnp.asarray(w3, jnp.float32).T                   # (H2, 1)
    else:
        prep["w3"] = jnp.asarray(w3, jnp.float32)                     # (out, H2)
    return prep


# ---------------------------------------------------------------------------
# Wrapper: batch-tiled pallas_call (batch on lanes inside the kernel)
# ---------------------------------------------------------------------------
def critic_forward(state, action, prep, tile_batch=2048):
    """Critic forward pass as a single fused, batch-tiled Pallas kernel.

    state:  (B, state_dim)  float32
    action: (B, action_dim) float32 or None
    prep:   output of prepare_params (kernel-layout weights/biases)
    returns (B, output_dim) float32
    """
    has_action = action is not None
    B, S = state.shape
    A = action.shape[1] if has_action else 0
    H1 = prep["w1s_t"].shape[0]
    H2 = prep["w2_t"].shape[0]
    out_dim = prep["b3"].shape[0]

    tb = _choose_tile(B, tile_batch)
    nt = pl.cdiv(B, tb)
    b_pad = nt * tb          # output padded to whole tiles; sliced off below

    def resident(arr):
        # Constant index_map -> same block every iteration -> stays VMEM-resident.
        # NOTE: for very large hidden sizes these could additionally be
        # single-buffered (pipeline_mode=pl.Buffered(1)) to halve their footprint.
        return pl.BlockSpec(arr.shape, lambda i: (0,) * arr.ndim)

    in_arrays = [state]
    in_specs = [pl.BlockSpec((tb, S), lambda i: (i, 0))]
    weights = [prep["w1s_t"]]
    if has_action:
        in_arrays.append(action)
        in_specs.append(pl.BlockSpec((tb, A), lambda i: (i, 0)))
        weights.append(prep["w1a_t"])
    weights += [prep["b1"], prep["w2_t"], prep["b2"], prep["w3"], prep["b3"]]
    in_specs += [resident(w) for w in weights]

    cp_kwargs = dict(dimension_semantics=("parallel",))
    est = _vmem_bytes_estimate(tb, S + A, H1, H2, out_dim)
    if est > 12 * 1024 * 1024:
        # Guardrail for large hidden sizes: raise the scoped-VMEM limit (16 MiB
        # default on v5e, 32 MiB on v6e/v7x), capped at v7x's 64 MiB physical.
        cp_kwargs["vmem_limit_bytes"] = int(min(2 * est, 64 * 1024 * 1024))

    kernel = _make_critic_kernel(has_action, out_dim)

    out_t = pl.pallas_call(
        kernel,
        out_shape=jax.ShapeDtypeStruct((out_dim, b_pad), jnp.float32),
        grid=(nt,),
        in_specs=in_specs,
        out_specs=pl.BlockSpec((out_dim, tb), lambda i: (0, i)),   # lane-dense store
        compiler_params=pltpu.CompilerParams(**cp_kwargs),
    )(*in_arrays, *weights)

    if b_pad != B:
        out_t = out_t[:, :B]
    return out_t.T                                                  # (B, out_dim)


# ---------------------------------------------------------------------------
# Deterministic parameter init in PyTorch layout (xavier-uniform, zero bias —
# mirrors the `weights_init_` typically used with this Critic).
# ---------------------------------------------------------------------------
def init_params(key, input_dim, hidden_size, output_dim=1):
    dims = [input_dim] + list(hidden_size) + [output_dim]
    params = {}
    keys = jax.random.split(key, len(dims) - 1)
    for idx, (d_in, d_out) in enumerate(zip(dims[:-1], dims[1:]), start=1):
        limit = jnp.sqrt(6.0 / (d_in + d_out))  # xavier_uniform gain=1
        params[f"w{idx}"] = jax.random.uniform(
            keys[idx - 1], (d_out, d_in), jnp.float32, -limit, limit)   # (out, in)
        params[f"b{idx}"] = jnp.zeros((d_out,), jnp.float32)
    return params


# ---------------------------------------------------------------------------
# Pure-JAX reference matching the kernel numerics (bf16 layer-1/2 operands,
# f32 accumulation, f32 value head); params in PyTorch layout.
# ---------------------------------------------------------------------------
def reference_forward(state, action, params):
    w1, b1 = params["w1"], params["b1"]
    w2, b2 = params["w2"], params["b2"]
    w3, b3 = params["w3"], params["b3"]
    x = state if action is None else jnp.concatenate([state, action], axis=1)
    h = jnp.dot(x.astype(jnp.bfloat16), w1.T.astype(jnp.bfloat16),
                preferred_element_type=jnp.float32) + b1
    h = jnp.tanh(h)
    h = jnp.dot(h.astype(jnp.bfloat16), w2.T.astype(jnp.bfloat16),
                preferred_element_type=jnp.float32) + b2
    h = jnp.tanh(h)
    return jnp.dot(h, w3.T, preferred_element_type=jnp.float32) + b3


if __name__ == "__main__":
    key = jax.random.PRNGKey(0)
    (k_s, k_a, k_p, k_p2, k_p3, k_s2, k_s3, k_a3) = jax.random.split(key, 8)

    jitted_forward = jax.jit(critic_forward, static_argnames=("tile_batch",))

    # --- Q-style critic: Critic(state_dim, hidden_size, action_dim) -------------
    # Small tile_batch so the run exercises the multi-tile pipelined path (4 tiles).
    B, state_dim, action_dim, hidden = 512, 16, 8, (32, 32)
    state = jax.random.normal(k_s, (B, state_dim), jnp.float32)
    action = jax.random.normal(k_a, (B, action_dim), jnp.float32)
    params = init_params(k_p, state_dim + action_dim, hidden, output_dim=1)
    prep = prepare_params(params, state_dim, action_dim)
    out = jax.block_until_ready(jitted_forward(state, action, prep, tile_batch=128))
    ref = reference_forward(state, action, params)
    assert out.shape == (B, 1)
    assert jnp.allclose(out, ref, atol=2e-3, rtol=2e-3), (
        float(jnp.max(jnp.abs(out - ref))))

    # --- V-style critic: Critic(state_dim, hidden_size), action=None ------------
    B2 = 64
    state_v = jax.random.normal(k_s2, (B2, state_dim), jnp.float32)
    params_v = init_params(k_p2, state_dim, hidden, output_dim=1)
    prep_v = prepare_params(params_v, state_dim, None)
    out_v = jax.block_until_ready(jitted_forward(state_v, None, prep_v))
    ref_v = reference_forward(state_v, None, params_v)
    assert out_v.shape == (B2, 1)
    assert jnp.allclose(out_v, ref_v, atol=2e-3, rtol=2e-3), (
        float(jnp.max(jnp.abs(out_v - ref_v))))

    # --- Multi-output head, uneven batch (padding/masking + f32 MXU head path) --
    B3, out_dim3 = 200, 4
    state_m = jax.random.normal(k_s3, (B3, state_dim), jnp.float32)
    action_m = jax.random.normal(k_a3, (B3, action_dim), jnp.float32)
    params_m = init_params(k_p3, state_dim + action_dim, hidden, output_dim=out_dim3)
    prep_m = prepare_params(params_m, state_dim, action_dim)
    out_m = jax.block_until_ready(jitted_forward(state_m, action_m, prep_m, tile_batch=128))
    ref_m = reference_forward(state_m, action_m, params_m)
    assert out_m.shape == (B3, out_dim3)
    assert jnp.allclose(out_m, ref_m, atol=2e-3, rtol=2e-3), (
        float(jnp.max(jnp.abs(out_m - ref_m))))

    print("KERNEL_OK")
</pallas_src>

<mosaic_0001>
module attributes {stable_mosaic.version = 11 : i64} {
  func.func @kernel(%arg0: i32, %arg1: memref<128x16xf32, #tpu.memory_space<vmem>>, %arg2: memref<128x8xf32, #tpu.memory_space<vmem>>, %arg3: memref<32x16xbf16, #tpu.memory_space<vmem>>, %arg4: memref<32x8xbf16, #tpu.memory_space<vmem>>, %arg5: memref<32x1xf32, #tpu.memory_space<vmem>>, %arg6: memref<32x32xbf16, #tpu.memory_space<vmem>>, %arg7: memref<32x1xf32, #tpu.memory_space<vmem>>, %arg8: memref<32x1xf32, #tpu.memory_space<vmem>>, %arg9: memref<1x1xf32, #tpu.memory_space<vmem>>, %arg10: memref<1x128xf32, #tpu.memory_space<vmem>>) attributes {dimension_semantics = [#tpu.dimension_semantics<parallel>], iteration_bounds = array<i64: 4>, scalar_prefetch = 0 : i64, scratch_operands = 0 : i64, tpu.core_type = #tpu.core_type<tc>, window_params = [{transform_indices = @transform_0, window_bounds = array<i64: 128, 16>}, {transform_indices = @transform_1, window_bounds = array<i64: 128, 8>}, {pipeline_mode = #tpu.pipeline_mode<synchronous>, transform_indices = @transform_2, window_bounds = array<i64: 32, 16>}, {pipeline_mode = #tpu.pipeline_mode<synchronous>, transform_indices = @transform_3, window_bounds = array<i64: 32, 8>}, {pipeline_mode = #tpu.pipeline_mode<synchronous>, transform_indices = @transform_4, window_bounds = array<i64: 32, 1>}, {pipeline_mode = #tpu.pipeline_mode<synchronous>, transform_indices = @transform_5, window_bounds = array<i64: 32, 32>}, {pipeline_mode = #tpu.pipeline_mode<synchronous>, transform_indices = @transform_6, window_bounds = array<i64: 32, 1>}, {pipeline_mode = #tpu.pipeline_mode<synchronous>, transform_indices = @transform_7, window_bounds = array<i64: 32, 1>}, {pipeline_mode = #tpu.pipeline_mode<synchronous>, transform_indices = @transform_8, window_bounds = array<i64: 1, 1>}, {transform_indices = @transform_9, window_bounds = array<i64: 1, 128>}]} {
    %c0 = arith.constant 0 : index
    %c0_0 = arith.constant 0 : index
    %0 = vector.load %arg3[%c0, %c0_0] : memref<32x16xbf16, #tpu.memory_space<vmem>>, vector<32x16xbf16>
    %c0_1 = arith.constant 0 : index
    %c0_2 = arith.constant 0 : index
    %1 = vector.load %arg1[%c0_1, %c0_2] : memref<128x16xf32, #tpu.memory_space<vmem>>, vector<128x16xf32>
    %2 = arith.truncf %1 : vector<128x16xf32> to vector<128x16xbf16>
    %cst = arith.constant dense<0.000000e+00> : vector<32x128xf32>
    %3 = tpu.matmul %0, %2, %cst {dimension_numbers = #tpu.dot_dimension_numbers<[1], [1], [0], [0], [0, 0, 1, 0], [], []>} : vector<32x16xbf16>, vector<128x16xbf16>, vector<32x128xf32> -> vector<32x128xf32>
    %c0_3 = arith.constant 0 : index
    %c0_4 = arith.constant 0 : index
    %4 = vector.load %arg4[%c0_3, %c0_4] : memref<32x8xbf16, #tpu.memory_space<vmem>>, vector<32x8xbf16>
    %c0_5 = arith.constant 0 : index
    %c0_6 = arith.constant 0 : index
    %5 = vector.load %arg2[%c0_5, %c0_6] : memref<128x8xf32, #tpu.memory_space<vmem>>, vector<128x8xf32>
    %6 = arith.truncf %5 : vector<128x8xf32> to vector<128x8xbf16>
    %cst_7 = arith.constant dense<0.000000e+00> : vector<32x128xf32>
    %7 = tpu.matmul %4, %6, %cst_7 {dimension_numbers = #tpu.dot_dimension_numbers<[1], [1], [0], [0], [0, 0, 1, 0], [], []>} : vector<32x8xbf16>, vector<128x8xbf16>, vector<32x128xf32> -> vector<32x128xf32>
    %8 = arith.addf %3, %7 : vector<32x128xf32>
    %c0_8 = arith.constant 0 : index
    %c0_9 = arith.constant 0 : index
    %9 = vector.load %arg5[%c0_8, %c0_9] : memref<32x1xf32, #tpu.memory_space<vmem>>, vector<32x1xf32>
    %10 = vector.broadcast %9 : vector<32x1xf32> to vector<32x128xf32>
    %11 = arith.addf %8, %10 : vector<32x128xf32>
    %12 = math.tanh %11 : vector<32x128xf32>
    %c0_10 = arith.constant 0 : index
    %c0_11 = arith.constant 0 : index
    %13 = vector.load %arg6[%c0_10, %c0_11] : memref<32x32xbf16, #tpu.memory_space<vmem>>, vector<32x32xbf16>
    %14 = arith.truncf %12 : vector<32x128xf32> to vector<32x128xbf16>
    %cst_12 = arith.constant dense<0.000000e+00> : vector<32x128xf32>
    %15 = tpu.matmul %13, %14, %cst_12 {dimension_numbers = #tpu.dot_dimension_numbers<[1], [0], [0], [1], [0, 0, 1, 1], [], []>} : vector<32x32xbf16>, vector<32x128xbf16>, vector<32x128xf32> -> vector<32x128xf32>
    %c0_13 = arith.constant 0 : index
    %c0_14 = arith.constant 0 : index
    %16 = vector.load %arg7[%c0_13, %c0_14] : memref<32x1xf32, #tpu.memory_space<vmem>>, vector<32x1xf32>
    %17 = vector.broadcast %16 : vector<32x1xf32> to vector<32x128xf32>
    %18 = arith.addf %15, %17 : vector<32x128xf32>
    %19 = math.tanh %18 : vector<32x128xf32>
    %c0_15 = arith.constant 0 : index
    %c0_16 = arith.constant 0 : index
    %20 = vector.load %arg8[%c0_15, %c0_16] : memref<32x1xf32, #tpu.memory_space<vmem>>, vector<32x1xf32>
    %21 = vector.broadcast %20 : vector<32x1xf32> to vector<32x128xf32>
    %22 = arith.mulf %19, %21 : vector<32x128xf32>
    %cst_17 = arith.constant dense<0.000000e+00> : vector<128xf32>
    %23 = vector.multi_reduction <add>, %22, %cst_17 [0] : vector<32x128xf32> to vector<128xf32>
    %24 = vector.shape_cast %23 : vector<128xf32> to vector<1x128xf32>
    %c0_18 = arith.constant 0 : index
    %c0_19 = arith.constant 0 : index
    %25 = vector.load %arg9[%c0_18, %c0_19] : memref<1x1xf32, #tpu.memory_space<vmem>>, vector<1x1xf32>
    %26 = vector.broadcast %25 : vector<1x1xf32> to vector<1x128xf32>
    %27 = arith.addf %24, %26 : vector<1x128xf32>
    %c0_20 = arith.constant 0 : index
    %c0_21 = arith.constant 0 : index
    %28 = vector.load %arg10[%c0_20, %c0_21] : memref<1x128xf32, #tpu.memory_space<vmem>>, vector<1x128xf32>
    tpu.vector_store %arg10[%c0_20, %c0_21], %27 {strides = array<i32>} : memref<1x128xf32, #tpu.memory_space<vmem>>, vector<1x128xf32>,
    return
  }
  func.func @transform_0(%arg0: i32) -> (i32, i32) {
    %c0_i32 = arith.constant 0 : i32
    %c0_i32_0 = arith.constant 0 : i32
    return %arg0, %c0_i32 : i32, i32
  }
  func.func @transform_1(%arg0: i32) -> (i32, i32) {
    %c0_i32 = arith.constant 0 : i32
    %c0_i32_0 = arith.constant 0 : i32
    return %arg0, %c0_i32 : i32, i32
  }
  func.func @transform_2(%arg0: i32) -> (i32, i32) {
    %c0_i32 = arith.constant 0 : i32
    %c0_i32_0 = arith.constant 0 : i32
    %c0_i32_1 = arith.constant 0 : i32
    return %c0_i32, %c0_i32_0 : i32, i32
  }
  func.func @transform_3(%arg0: i32) -> (i32, i32) {
    %c0_i32 = arith.constant 0 : i32
    %c0_i32_0 = arith.constant 0 : i32
    %c0_i32_1 = arith.constant 0 : i32
    return %c0_i32, %c0_i32_0 : i32, i32
  }
  func.func @transform_4(%arg0: i32) -> (i32, i32) {
    %c0_i32 = arith.constant 0 : i32
    %c0_i32_0 = arith.constant 0 : i32
    %c0_i32_1 = arith.constant 0 : i32
    return %c0_i32, %c0_i32_0 : i32, i32
  }
  func.func @transform_5(%arg0: i32) -> (i32, i32) {
    %c0_i32 = arith.constant 0 : i32
    %c0_i32_0 = arith.constant 0 : i32
    %c0_i32_1 = arith.constant 0 : i32
    return %c0_i32, %c0_i32_0 : i32, i32
  }
  func.func @transform_6(%arg0: i32) -> (i32, i32) {
    %c0_i32 = arith.constant 0 : i32
    %c0_i32_0 = arith.constant 0 : i32
    %c0_i32_1 = arith.constant 0 : i32
    return %c0_i32, %c0_i32_0 : i32, i32
  }
  func.func @transform_7(%arg0: i32) -> (i32, i32) {
    %c0_i32 = arith.constant 0 : i32
    %c0_i32_0 = arith.constant 0 : i32
    %c0_i32_1 = arith.constant 0 : i32
    return %c0_i32, %c0_i32_0 : i32, i32
  }
  func.func @transform_8(%arg0: i32) -> (i32, i32) {
    %c0_i32 = arith.constant 0 : i32
    %c0_i32_0 = arith.constant 0 : i32
    %c0_i32_1 = arith.constant 0 : i32
    return %c0_i32, %c0_i32_0 : i32, i32
  }
  func.func @transform_9(%arg0: i32) -> (i32, i32) {
    %c0_i32 = arith.constant 0 : i32
    %c0_i32_0 = arith.constant 0 : i32
    return %c0_i32, %arg0 : i32, i32
  }
}

</mosaic_0001>

<llo_original>
// kernel: critic_forward.1
$region0: #{critic_forward.1}
  #allocation0 [shape = 'u32[]', space=smem, size = 0x4, offset = 0x4, fixed_abs, tag = 'smem constant byte address 0x4 - core index']
  #allocation1 [shape = 'u32[144,128]{1,0:T(1,128)}', space=vmem, size = 0x12000, scoped, tag = 'internal scratch']
  #allocation2 [shape = 'f32[1,1]{1,0:T(1,128)S(1)}', space=vmem, size = 0x200, scoped, tag = 'scoped memory for critic_forward.1']
  %s0 = inlined_call_operand.vmem [shape: f32[512,16], index: 0, kind: input, shape index: {}]
  %s1 = inlined_call_operand.vmem [shape: f32[512,8], index: 1, kind: input, shape index: {}]
  %s2 = inlined_call_operand.vmem [shape: bf16[32,16], index: 2, kind: input, shape index: {}]
  %s3 = inlined_call_operand.vmem [shape: bf16[32,8], index: 3, kind: input, shape index: {}]
  %s4 = inlined_call_operand.vmem [shape: f32[32,1], index: 4, kind: input, shape index: {}]
  %s5 = inlined_call_operand.vmem [shape: bf16[32,32], index: 5, kind: input, shape index: {}]
  %s6 = inlined_call_operand.vmem [shape: f32[32,1], index: 6, kind: input, shape index: {}]
  %s7 = inlined_call_operand.vmem [shape: f32[32,1], index: 7, kind: input, shape index: {}]
  %s8 = inlined_call_operand.<no memory space> [shape: f32[1,1], index: 8, kind: input, shape index: {}]
  %s9 = inlined_call_operand.hbm [shape: f32[1,512], index: 9, kind: output, shape index: {}]
  %s10 = sld [smem:[#allocation0]]
  $region69: #{critic_forward.1} parent=0
    _
  %s12 = ssub.s32 1, %s10
  %s13 = scalar_select 0, %s12, %s10
  %v14 = vstv %s8
  %15 = vst [vmem:[#allocation2] sm:$0x1] %v14
  $region1: #{critic_forward.1} parent=0
    #allocation3 [shape = 'u8[1024]{0}', space=vmem, size = 0x400, scoped, tag = 'output window, operand 0']
    #allocation4 [shape = 's32[2]{0}', space=sflag, size = 0x8, scoped, tag = 'scoped memory for critic_forward.1']
    %16 = vsyncpa [#allocation4], 0
    %s17 = scalar_lea.sflag [#allocation4], 1
    %18 = vsyncpa %s17, 0
    loop: start=0, step=1, limit=6
    $region2: #{critic_forward.1} parent=1 // loop_pre_header
      _
    $region3: #{critic_forward.1} parent=1 // loop_header
      %s20 = sphi 0, %s24
      %p21 = scmp.ge.s32.totalorder %s20, 6
      %s30 = sphi 0, %s32
      %s33 = sphi 0, %s30
      %s34 = sphi 0, %s33
      %s50 = sphi 0, %s34
      %s56 = sphi 0, %s58
      %s59 = sphi 0, %s56
      %s60 = sphi 0, %s59
      %s76 = sphi 0, %s60
      %s80 = sphi 0, %s80
      %s82 = sphi 0, %s80
      %s83 = sphi 0, %s82
      %s97 = sphi 0, %s83
      %s101 = sphi 0, %s101
      %s103 = sphi 0, %s101
      %s104 = sphi 0, %s103
      %s118 = sphi 0, %s104
      %s122 = sphi 0, %s122
      %s124 = sphi 0, %s122
      %s125 = sphi 0, %s124
      %s139 = sphi 0, %s125
      %s143 = sphi 0, %s143
      %s145 = sphi 0, %s143
      %s146 = sphi 0, %s145
      %s160 = sphi 0, %s146
      %s164 = sphi 0, %s164
      %s166 = sphi 0, %s164
      %s167 = sphi 0, %s166
      %s181 = sphi 0, %s167
      %s185 = sphi 0, %s185
      %s187 = sphi 0, %s185
      %s188 = sphi 0, %s187
      %s202 = sphi 0, %s188
      %s206 = sphi 0, %s206
      %s208 = sphi 0, %s206
      %s209 = sphi 0, %s208
      %s223 = sphi 0, %s209
      %s229 = sphi 0, %s231
      %s232 = sphi 0, %s229
      %s233 = sphi 0, %s232
      %s249 = sphi 0, %s233
    $region4: #{critic_forward.1} parent=1 // loop_header_branch
      %23 = sbr.rel (%p21) target = $region8
    $region5: #{critic_forward.1} parent=1 // loop_body
      %s25 = ssub.s32 %s20, 1
      %s26 = ssub.s32 %s20, 2
      %s27 = sadd.s32 %s20, 1
      %s28 = ssub.s32 %s20, %s27
      %p29 = scmp.eq.s32.totalorder %s28, 0
      %s31 = sadd.s32 %s30, 1
      %s32 = scalar_select %p29, %s30, %s31
      %p35 = pneg %p29
      %p36 = scmp.eq.s32.totalorder %s20, 3
      %p37 = por %p35, %p36
      %p38 = scmp.ne.s32.totalorder %s30, %s33
      %p39 = scmp.eq.s32.totalorder %s20, 0
      %p40 = por %p38, %p39
      %p41 = scmp.ne.s32.totalorder %s30, %s33
      %p42 = scmp.eq.s32.totalorder %s25, 3
      %p43 = por %p41, %p42
      %p44 = scmp.ne.s32.totalorder %s33, %s34
      %p45 = scmp.eq.s32.totalorder %s25, 0
      %p46 = por %p44, %p45
      %p47 = scmp.ne.s32.totalorder %s33, %s34
      %p48 = scmp.eq.s32.totalorder %s26, 3
      %p49 = por %p47, %p48
      %p51 = scmp.ne.s32.totalorder %s34, %s50
      %p52 = scmp.eq.s32.totalorder %s26, 0
      %p53 = por %p51, %p52
      %s54 = ssub.s32 %s20, %s27
      %p55 = scmp.eq.s32.totalorder %s54, 0
      %s57 = sadd.s32 %s56, 1
      %s58 = scalar_select %p55, %s56, %s57
      %p61 = pneg %p55
      %p62 = scmp.eq.s32.totalorder %s20, 3
      %p63 = por %p61, %p62
      %p64 = scmp.ne.s32.totalorder %s56, %s59
      %p65 = scmp.eq.s32.totalorder %s20, 0
      %p66 = por %p64, %p65
      %p67 = scmp.ne.s32.totalorder %s56, %s59
      %p68 = scmp.eq.s32.totalorder %s25, 3
      %p69 = por %p67, %p68
      %p70 = scmp.ne.s32.totalorder %s59, %s60
      %p71 = scmp.eq.s32.totalorder %s25, 0
      %p72 = por %p70, %p71
      %p73 = scmp.ne.s32.totalorder %s59, %s60
      %p74 = scmp.eq.s32.totalorder %s26, 3
      %p75 = por %p73, %p74
      %p77 = scmp.ne.s32.totalorder %s60, %s76
      %p78 = scmp.eq.s32.totalorder %s26, 0
      %p79 = por %p77, %p78
      %s81 = sadd.s32 %s80, 1
      %p84 = scmp.eq.s32.totalorder %s20, 3
      %p85 = scmp.ne.s32.totalorder %s80, %s82
      %p86 = scmp.eq.s32.totalorder %s20, 0
      %p87 = por %p85, %p86
      %p88 = scmp.ne.s32.totalorder %s80, %s82
      %p89 = scmp.eq.s32.totalorder %s25, 3
      %p90 = por %p88, %p89
      %p91 = scmp.ne.s32.totalorder %s82, %s83
      %p92 = scmp.eq.s32.totalorder %s25, 0
      %p93 = por %p91, %p92
      %p94 = scmp.ne.s32.totalorder %s82, %s83
      %p95 = scmp.eq.s32.totalorder %s26, 3
      %p96 = por %p94, %p95
      %p98 = scmp.ne.s32.totalorder %s83, %s97
      %p99 = scmp.eq.s32.totalorder %s26, 0
      %p100 = por %p98, %p99
      %s102 = sadd.s32 %s101, 1
      %p105 = scmp.eq.s32.totalorder %s20, 3
      %p106 = scmp.ne.s32.totalorder %s101, %s103
      %p107 = scmp.eq.s32.totalorder %s20, 0
      %p108 = por %p106, %p107
      %p109 = scmp.ne.s32.totalorder %s101, %s103
      %p110 = scmp.eq.s32.totalorder %s25, 3
      %p111 = por %p109, %p110
      %p112 = scmp.ne.s32.totalorder %s103, %s104
      %p113 = scmp.eq.s32.totalorder %s25, 0
      %p114 = por %p112, %p113
      %p115 = scmp.ne.s32.totalorder %s103, %s104
      %p116 = scmp.eq.s32.totalorder %s26, 3
      %p117 = por %p115, %p116
      %p119 = scmp.ne.s32.totalorder %s104, %s118
      %p120 = scmp.eq.s32.totalorder %s26, 0
      %p121 = por %p119, %p120
      %s123 = sadd.s32 %s122, 1
      %p126 = scmp.eq.s32.totalorder %s20, 3
      %p127 = scmp.ne.s32.totalorder %s122, %s124
      %p128 = scmp.eq.s32.totalorder %s20, 0
      %p129 = por %p127, %p128
      %p130 = scmp.ne.s32.totalorder %s122, %s124
      %p131 = scmp.eq.s32.totalorder %s25, 3
      %p132 = por %p130, %p131
      %p133 = scmp.ne.s32.totalorder %s124, %s125
      %p134 = scmp.eq.s32.totalorder %s25, 0
      %p135 = por %p133, %p134
      %p136 = scmp.ne.s32.totalorder %s124, %s125
      %p137 = scmp.eq.s32.totalorder %s26, 3
      %p138 = por %p136, %p137
      %p140 = scmp.ne.s32.totalorder %s125, %s139
      %p141 = scmp.eq.s32.totalorder %s26, 0
      %p142 = por %p140, %p141
      %s144 = sadd.s32 %s143, 1
      %p147 = scmp.eq.s32.totalorder %s20, 3
      %p148 = scmp.ne.s32.totalorder %s143, %s145
      %p149 = scmp.eq.s32.totalorder %s20, 0
      %p150 = por %p148, %p149
      %p151 = scmp.ne.s32.totalorder %s143, %s145
      %p152 = scmp.eq.s32.totalorder %s25, 3
      %p153 = por %p151, %p152
      %p154 = scmp.ne.s32.totalorder %s145, %s146
      %p155 = scmp.eq.s32.totalorder %s25, 0
      %p156 = por %p154, %p155
      %p157 = scmp.ne.s32.totalorder %s145, %s146
      %p158 = scmp.eq.s32.totalorder %s26, 3
      %p159 = por %p157, %p158
      %p161 = scmp.ne.s32.totalorder %s146, %s160
      %p162 = scmp.eq.s32.totalorder %s26, 0
      %p163 = por %p161, %p162
      %s165 = sadd.s32 %s164, 1
      %p168 = scmp.eq.s32.totalorder %s20, 3
      %p169 = scmp.ne.s32.totalorder %s164, %s166
      %p170 = scmp.eq.s32.totalorder %s20, 0
      %p171 = por %p169, %p170
      %p172 = scmp.ne.s32.totalorder %s164, %s166
      %p173 = scmp.eq.s32.totalorder %s25, 3
      %p174 = por %p172, %p173
      %p175 = scmp.ne.s32.totalorder %s166, %s167
      %p176 = scmp.eq.s32.totalorder %s25, 0
      %p177 = por %p175, %p176
      %p178 = scmp.ne.s32.totalorder %s166, %s167
      %p179 = scmp.eq.s32.totalorder %s26, 3
      %p180 = por %p178, %p179
      %p182 = scmp.ne.s32.totalorder %s167, %s181
      %p183 = scmp.eq.s32.totalorder %s26, 0
      %p184 = por %p182, %p183
      %s186 = sadd.s32 %s185, 1
      %p189 = scmp.eq.s32.totalorder %s20, 3
      %p190 = scmp.ne.s32.totalorder %s185, %s187
      %p191 = scmp.eq.s32.totalorder %s20, 0
      %p192 = por %p190, %p191
      %p193 = scmp.ne.s32.totalorder %s185, %s187
      %p194 = scmp.eq.s32.totalorder %s25, 3
      %p195 = por %p193, %p194
      %p196 = scmp.ne.s32.totalorder %s187, %s188
      %p197 = scmp.eq.s32.totalorder %s25, 0
      %p198 = por %p196, %p197
      %p199 = scmp.ne.s32.totalorder %s187, %s188
      %p200 = scmp.eq.s32.totalorder %s26, 3
      %p201 = por %p199, %p200
      %p203 = scmp.ne.s32.totalorder %s188, %s202
      %p204 = scmp.eq.s32.totalorder %s26, 0
      %p205 = por %p203, %p204
      %s207 = sadd.s32 %s206, 1
      %p210 = scmp.eq.s32.totalorder %s20, 3
      %p211 = scmp.ne.s32.totalorder %s206, %s208
      %p212 = scmp.eq.s32.totalorder %s20, 0
      %p213 = por %p211, %p212
      %p214 = scmp.ne.s32.totalorder %s206, %s208
      %p215 = scmp.eq.s32.totalorder %s25, 3
      %p216 = por %p214, %p215
      %p217 = scmp.ne.s32.totalorder %s208, %s209
      %p218 = scmp.eq.s32.totalorder %s25, 0
      %p219 = por %p217, %p218
      %p220 = scmp.ne.s32.totalorder %s208, %s209
      %p221 = scmp.eq.s32.totalorder %s26, 3
      %p222 = por %p220, %p221
      %p224 = scmp.ne.s32.totalorder %s209, %s223
      %p225 = scmp.eq.s32.totalorder %s26, 0
      %p226 = por %p224, %p225
      %s227 = ssub.s32 %s20, %s27
      %p228 = scmp.eq.s32.totalorder %s227, 0
      %s230 = sadd.s32 %s229, 1
      %s231 = scalar_select %p228, %s229, %s230
      %p234 = pneg %p228
      %p235 = scmp.eq.s32.totalorder %s20, 3
      %p236 = por %p234, %p235
      %p237 = scmp.ne.s32.totalorder %s229, %s232
      %p238 = scmp.eq.s32.totalorder %s20, 0
      %p239 = por %p237, %p238
      %p240 = scmp.ne.s32.totalorder %s229, %s232
      %p241 = scmp.eq.s32.totalorder %s25, 3
      %p242 = por %p240, %p241
      %p243 = scmp.ne.s32.totalorder %s232, %s233
      %p244 = scmp.eq.s32.totalorder %s25, 0
      %p245 = por %p243, %p244
      %p246 = scmp.ne.s32.totalorder %s232, %s233
      %p247 = scmp.eq.s32.totalorder %s26, 3
      %p248 = por %p246, %p247
      %p250 = scmp.ne.s32.totalorder %s233, %s249
      %p251 = scmp.eq.s32.totalorder %s26, 0
      %p252 = por %p250, %p251
      %p253 = scmp.le.s32.totalorder 1, %s20
      %p254 = scmp.lt.s32.totalorder %s20, 5
      %p255 = pnand %p253, %p254
      %p256 = pneg %p255
      // Predicated region
      $region9: #{critic_forward.1} parent=5 // pred_check
        _
      $region10: #{critic_forward.1} parent=5 // pred_check_branch
        %258 = sbr.rel (%p255) target = $region12
      $region11: #{critic_forward.1} parent=5 // pred_region
        %s259 = ssub.s32 %s20, 1
        // Predicated region
        $region13: #{critic_forward.1} parent=11 // pred_check
          %p260 = pneg %p93
        $region14: #{critic_forward.1} parent=11 // pred_check_branch
          %262 = sbr.rel (%p260) target = $region16
        $region15: #{critic_forward.1} parent=11 // pred_region
          _
        $region16: #{critic_forward.1} parent=11 // pred_fallthru
          _
        // Predicated region
        $region17: #{critic_forward.1} parent=11 // pred_check
          %p263 = pneg %p114
        $region18: #{critic_forward.1} parent=11 // pred_check_branch
          %265 = sbr.rel (%p263) target = $region20
        $region19: #{critic_forward.1} parent=11 // pred_region
          _
        $region20: #{critic_forward.1} parent=11 // pred_fallthru
          _
        // Predicated region
        $region21: #{critic_forward.1} parent=11 // pred_check
          %p266 = pneg %p135
        $region22: #{critic_forward.1} parent=11 // pred_check_branch
          %268 = sbr.rel (%p266) target = $region24
        $region23: #{critic_forward.1} parent=11 // pred_region
          _
        $region24: #{critic_forward.1} parent=11 // pred_fallthru
          _
        // Predicated region
        $region25: #{critic_forward.1} parent=11 // pred_check
          %p269 = pneg %p156
        $region26: #{critic_forward.1} parent=11 // pred_check_branch
          %271 = sbr.rel (%p269) target = $region28
        $region27: #{critic_forward.1} parent=11 // pred_region
          _
        $region28: #{critic_forward.1} parent=11 // pred_fallthru
          _
        // Predicated region
        $region29: #{critic_forward.1} parent=11 // pred_check
          %p272 = pneg %p177
        $region30: #{critic_forward.1} parent=11 // pred_check_branch
          %274 = sbr.rel (%p272) target = $region32
        $region31: #{critic_forward.1} parent=11 // pred_region
          _
        $region32: #{critic_forward.1} parent=11 // pred_fallthru
          _
        // Predicated region
        $region33: #{critic_forward.1} parent=11 // pred_check
          %p275 = pneg %p198
        $region34: #{critic_forward.1} parent=11 // pred_check_branch
          %277 = sbr.rel (%p275) target = $region36
        $region35: #{critic_forward.1} parent=11 // pred_region
          _
        $region36: #{critic_forward.1} parent=11 // pred_fallthru
          _
        // Predicated region
        $region37: #{critic_forward.1} parent=11 // pred_check
          %p278 = pneg %p219
        $region38: #{critic_forward.1} parent=11 // pred_check_branch
          %280 = sbr.rel (%p278) target = $region40
        $region39: #{critic_forward.1} parent=11 // pred_region
          _
        $region40: #{critic_forward.1} parent=11 // pred_fallthru
          _
      $region12: #{critic_forward.1} parent=5 // pred_fallthru
        _
      %p281 = scmp.lt.s32.totalorder %s20, 4
      // Predicated region
      $region41: #{critic_forward.1} parent=5 // pred_check
        %p282 = pneg %p281
      $region42: #{critic_forward.1} parent=5 // pred_check_branch
        %284 = sbr.rel (%p282) target = $region44
      $region43: #{critic_forward.1} parent=5 // pred_region
        // Predicated region
        $region45: #{critic_forward.1} parent=43 // pred_check
          %p285 = pneg %p40
        $region46: #{critic_forward.1} parent=43 // pred_check_branch
          %287 = sbr.rel (%p285) target = $region48
        $region47: #{critic_forward.1} parent=43 // pred_region
          %s288 = smul.u32 16, %s20
          %p289 = scmp.lt.s32.totalorder %s288, 63
          %s290 = scalar_select %p289, %s288, 63
          %s291 = smul.addr %s290, 8
          %s292 = scalar_lea.vmem %s0, %s291
          %s293 = smul.u32 16, %s20
        $region48: #{critic_forward.1} parent=43 // pred_fallthru
          _
        // Predicated region
        $region49: #{critic_forward.1} parent=43 // pred_check
          %p294 = pneg %p66
        $region50: #{critic_forward.1} parent=43 // pred_check_branch
          %296 = sbr.rel (%p294) target = $region52
        $region51: #{critic_forward.1} parent=43 // pred_region
          %s297 = smul.u32 16, %s20
          %p298 = scmp.lt.s32.totalorder %s297, 63
          %s299 = scalar_select %p298, %s297, 63
          %s300 = smul.addr %s299, 8
          %s301 = scalar_lea.vmem %s1, %s300
          %s302 = smul.u32 16, %s20
        $region52: #{critic_forward.1} parent=43 // pred_fallthru
          _
      $region44: #{critic_forward.1} parent=5 // pred_fallthru
        _
      %p303 = scmp.le.s32.totalorder 1, %s20
      %p304 = scmp.lt.s32.totalorder %s20, 5
      %p305 = pnand %p303, %p304
      %p306 = pneg %p305
      // Predicated region
      $region53: #{critic_forward.1} parent=5 // pred_check
        _
      $region54: #{critic_forward.1} parent=5 // pred_check_branch
        %308 = sbr.rel (%p305) target = $region56
      $region55: #{critic_forward.1} parent=5 // pred_region
        %s309 = ssub.s32 %s20, 1
        %s310 = smul.u32 16, %s25
        %p311 = scmp.lt.s32.totalorder %s310, 63
        %s312 = scalar_select %p311, %s310, 63
        %s313 = smul.addr %s312, 8
        %s314 = scalar_lea.vmem %s0, %s313
        %p315 = pneg %p46
        %p316 = pneg %p43
        %s317 = smul.u32 16, %s25
        %p318 = scmp.lt.s32.totalorder %s317, 63
        %s319 = scalar_select %p318, %s317, 63
        %s320 = smul.addr %s319, 8
        %s321 = scalar_lea.vmem %s1, %s320
        %p322 = pneg %p72
        %p323 = pneg %p69
        %p324 = pneg %p93
        %p325 = pneg %p90
        %p326 = pneg %p114
        %p327 = pneg %p111
        %p328 = pneg %p135
        %p329 = pneg %p132
        %p330 = pneg %p156
        %p331 = pneg %p153
        %p332 = pneg %p177
        %p333 = pneg %p174
        %p334 = pneg %p198
        %p335 = pneg %p195
        %p336 = pneg %p219
        %p337 = pneg %p216
        %p338 = pneg %p245
        %p339 = pneg %p242
        %s340 = sand.u32 %s232, 1
        %s341 = scalar_lea.sflag [#allocation4], %s340
        %s342 = sand.u32 %s232, 1
        %s343 = scalar_lea.vmem [#allocation3], %s342
        %s344 = smul.u32 16, %s25
        %p345 = scmp.lt.s32.totalorder %s344, 63
        %s346 = scalar_select %p345, %s344, 63
        %s347 = smul.addr %s346, 8
        %s348 = scalar_lea.vmem %s0, %s347
        %s349 = smul.u32 16, %s25
        %s350 = smul.u32 16, %s25
        %p351 = scmp.lt.s32.totalorder %s350, 63
        %s352 = scalar_select %p351, %s350, 63
        %s353 = smul.addr %s352, 8
        %s354 = scalar_lea.vmem %s1, %s353
        %s355 = smul.u32 16, %s25
        %v357 = vld [vmem:[%s2] sm:$0xf]
        %v358 = vld [vmem:[%s2 + $0x4] sm:$0xf]
        %v359 = vld [vmem:[%s2 + $0x8] sm:$0xf]
        %v360 = vld [vmem:[%s2 + $0xc] sm:$0xf]
        %v361 = vld [vmem:[%s348] sm:$0xff]
        %v362 = vld [vmem:[%s348 + $0x8] sm:$0xff]
        %v363 = vld [vmem:[%s348 + $0x10] sm:$0xff]
        %v364 = vld [vmem:[%s348 + $0x18] sm:$0xff]
        %v365 = vld [vmem:[%s348 + $0x20] sm:$0xff]
        %v366 = vld [vmem:[%s348 + $0x28] sm:$0xff]
        %v367 = vld [vmem:[%s348 + $0x30] sm:$0xff]
        %v368 = vld [vmem:[%s348 + $0x38] sm:$0xff]
        %v369 = vld [vmem:[%s348 + $0x40] sm:$0xff]
        %v370 = vld [vmem:[%s348 + $0x48] sm:$0xff]
        %v371 = vld [vmem:[%s348 + $0x50] sm:$0xff]
        %v372 = vld [vmem:[%s348 + $0x58] sm:$0xff]
        %v373 = vld [vmem:[%s348 + $0x60] sm:$0xff]
        %v374 = vld [vmem:[%s348 + $0x68] sm:$0xff]
        %v375 = vld [vmem:[%s348 + $0x70] sm:$0xff]
        %v376 = vld [vmem:[%s348 + $0x78] sm:$0xff]
        %v377 = vpack.c.bf16 %v362, %v361
        %v378 = vpack.c.bf16 %v364, %v363
        %v379 = vpack.c.bf16 %v366, %v365
        %v380 = vpack.c.bf16 %v368, %v367
        %v381 = vpack.c.bf16 %v370, %v369
        %v382 = vpack.c.bf16 %v372, %v371
        %v383 = vpack.c.bf16 %v374, %v373
        %v384 = vpack.c.bf16 %v376, %v375
        %v385 = vld [vmem:[%s3] sm:$0xf]
        %v386 = vld [vmem:[%s3 + $0x4] sm:$0xf]
        %v387 = vld [vmem:[%s3 + $0x8] sm:$0xf]
        %v388 = vld [vmem:[%s3 + $0xc] sm:$0xf]
        %v389 = vld [vmem:[%s354] sm:$0xff]
        %v390 = vld [vmem:[%s354 + $0x8] sm:$0xff]
        %v391 = vld [vmem:[%s354 + $0x10] sm:$0xff]
        %v392 = vld [vmem:[%s354 + $0x18] sm:$0xff]
        %v393 = vld [vmem:[%s354 + $0x20] sm:$0xff]
        %v394 = vld [vmem:[%s354 + $0x28] sm:$0xff]
        %v395 = vld [vmem:[%s354 + $0x30] sm:$0xff]
        %v396 = vld [vmem:[%s354 + $0x38] sm:$0xff]
        %v397 = vld [vmem:[%s354 + $0x40] sm:$0xff]
        %v398 = vld [vmem:[%s354 + $0x48] sm:$0xff]
        %v399 = vld [vmem:[%s354 + $0x50] sm:$0xff]
        %v400 = vld [vmem:[%s354 + $0x58] sm:$0xff]
        %v401 = vld [vmem:[%s354 + $0x60] sm:$0xff]
        %v402 = vld [vmem:[%s354 + $0x68] sm:$0xff]
        %v403 = vld [vmem:[%s354 + $0x70] sm:$0xff]
        %v404 = vld [vmem:[%s354 + $0x78] sm:$0xff]
        %v405 = vpack.c.bf16 %v390, %v389
        %v406 = vpack.c.bf16 %v392, %v391
        %v407 = vpack.c.bf16 %v394, %v393
        %v408 = vpack.c.bf16 %v396, %v395
        %v409 = vpack.c.bf16 %v398, %v397
        %v410 = vpack.c.bf16 %v400, %v399
        %v411 = vpack.c.bf16 %v402, %v401
        %v412 = vpack.c.bf16 %v404, %v403
        %v417 = vunpack.c.l.b16 %v385
        %v418 = vunpack.c.l.b16 %v386
        %v419 = vunpack.c.l.b16 %v387
        %v420 = vunpack.c.l.b16 %v388
        %v421 = vpack.c.b16 %v418, %v417
        %v422 = vpack.c.b16 %v420, %v419
        %vm423 = vcmask 64512
        %v425 = vsel %vm423, %v421, 0
        %v428 = vsel %vm423, %v422, 0
        %v431 = vsel %vm423, %v405, 0
        %v434 = vsel %vm423, %v406, 0
        %v437 = vsel %vm423, %v407, 0
        %v440 = vsel %vm423, %v408, 0
        %v443 = vsel %vm423, %v409, 0
        %v446 = vsel %vm423, %v410, 0
        %v449 = vsel %vm423, %v411, 0
        %v452 = vsel %vm423, %v412, 0
        %454 = vmatprep.subr.bf16.mxu0 0
        %455 = vmatpush1.bf16.xpose.msra.mxu0 %v431
        %456 = vmatprep.subr.bf16.mxu0 0
        %457 = vmatpush1.bf16.xpose.msra.mxu0 %v434
        %458 = vmatprep.subr.bf16.mxu0 0
        %459 = vmatpush1.bf16.xpose.msra.mxu0 %v437
        %460 = vmatprep.subr.bf16.mxu0 0
        %461 = vmatpush1.bf16.xpose.msra.mxu0 %v440
        %462 = vmatprep.subr.bf16.mxu0 0
        %463 = vmatpush1.bf16.xpose.msra.mxu0 %v443
        %464 = vmatprep.subr.bf16.mxu0 0
        %465 = vmatpush1.bf16.xpose.msra.mxu0 %v446
        %466 = vmatprep.subr.bf16.mxu0 0
        %467 = vmatpush1.bf16.xpose.msra.mxu0 %v449
        %468 = vmatprep.subr.bf16.mxu0 0
        %469 = vmatpush1.bf16.xpose.msra.mxu0 %v452
        %470 = vmatprep.subr.bf16.mxu0 0
        %471 = vmatpush1.bf16.xpose.msra.mxu0 0
        %472 = vmatprep.subr.bf16.mxu0 0
        %473 = vmatpush1.bf16.xpose.msra.mxu0 0
        %474 = vmatprep.subr.bf16.mxu0 0
        %475 = vmatpush1.bf16.xpose.msra.mxu0 0
        %476 = vmatprep.subr.bf16.mxu0 0
        %477 = vmatpush1.bf16.xpose.msra.mxu0 0
        %478 = vmatprep.subr.bf16.mxu0 0
        %479 = vmatpush1.bf16.xpose.msra.mxu0 0
        %480 = vmatprep.subr.bf16.mxu0 0
        %481 = vmatpush1.bf16.xpose.msra.mxu0 0
        %482 = vmatprep.subr.bf16.mxu0 0
        %483 = vmatpush1.bf16.xpose.msra.mxu0 0
        %484 = vmatprep.subr.bf16.mxu0 0
        %485 = vmatpush1.bf16.xpose.msra.mxu0 0
        %486 = vmatprep.mubr.bf16.mxu0 0
        %487 = vmatmul.mubr.bf16.gmra.mrb[0].mxu0 %v425
        %v488 = vpop.f32.mrb[0].mxu0
        %v489 = vadd.f32 0.0, %v488
        %v490 = vpop.f32.mrb[0].mxu0
        %v491 = vpop.f32.mrb[0].mxu0
        %v492 = vadd.f32 0.0, %v491
        %v493 = vpop.f32.mrb[0].mxu0
        %494 = vmatprep.mubr.bf16.mxu0 0
        %495 = vmatmul.mubr.bf16.gmra.mrb[0].mxu0 %v428
        %v496 = vpop.f32.mrb[0].mxu0
        %v497 = vadd.f32 0.0, %v496
        %v498 = vpop.f32.mrb[0].mxu0
        %v499 = vpop.f32.mrb[0].mxu0
        %v500 = vadd.f32 0.0, %v499
        %v501 = vpop.f32.mrb[0].mxu0
        %502 = vdwg.mxu0
        %v507 = vunpack.c.l.b16 %v357
        %v508 = vunpack.c.l.b16 %v358
        %v509 = vunpack.c.l.b16 %v359
        %v510 = vunpack.c.l.b16 %v360
        %v511 = vpack.c.b16 %v508, %v507
        %v512 = vpack.c.b16 %v510, %v509
        %vm513 = vcmask 130048
        %v515 = vsel %vm513, %v511, 0
        %v518 = vsel %vm513, %v512, 0
        %v521 = vsel %vm513, %v377, 0
        %v524 = vsel %vm513, %v378, 0
        %v527 = vsel %vm513, %v379, 0
        %v530 = vsel %vm513, %v380, 0
        %v533 = vsel %vm513, %v381, 0
        %v536 = vsel %vm513, %v382, 0
        %v539 = vsel %vm513, %v383, 0
        %v542 = vsel %vm513, %v384, 0
        %544 = vmatprep.subr.bf16.mxu0 0
        %545 = vmatpush1.bf16.xpose.msra.mxu0 %v521
        %546 = vmatprep.subr.bf16.mxu0 0
        %547 = vmatpush1.bf16.xpose.msra.mxu0 %v524
        %548 = vmatprep.subr.bf16.mxu0 0
        %549 = vmatpush1.bf16.xpose.msra.mxu0 %v527
        %550 = vmatprep.subr.bf16.mxu0 0
        %551 = vmatpush1.bf16.xpose.msra.mxu0 %v530
        %552 = vmatprep.subr.bf16.mxu0 0
        %553 = vmatpush1.bf16.xpose.msra.mxu0 %v533
        %554 = vmatprep.subr.bf16.mxu0 0
        %555 = vmatpush1.bf16.xpose.msra.mxu0 %v536
        %556 = vmatprep.subr.bf16.mxu0 0
        %557 = vmatpush1.bf16.xpose.msra.mxu0 %v539
        %558 = vmatprep.subr.bf16.mxu0 0
        %559 = vmatpush1.bf16.xpose.msra.mxu0 %v542
        %560 = vmatprep.subr.bf16.mxu0 0
        %561 = vmatpush1.bf16.xpose.msra.mxu0 0
        %562 = vmatprep.subr.bf16.mxu0 0
        %563 = vmatpush1.bf16.xpose.msra.mxu0 0
        %564 = vmatprep.subr.bf16.mxu0 0
        %565 = vmatpush1.bf16.xpose.msra.mxu0 0
        %566 = vmatprep.subr.bf16.mxu0 0
        %567 = vmatpush1.bf16.xpose.msra.mxu0 0
        %568 = vmatprep.subr.bf16.mxu0 0
        %569 = vmatpush1.bf16.xpose.msra.mxu0 0
        %570 = vmatprep.subr.bf16.mxu0 0
        %571 = vmatpush1.bf16.xpose.msra.mxu0 0
        %572 = vmatprep.subr.bf16.mxu0 0
        %573 = vmatpush1.bf16.xpose.msra.mxu0 0
        %574 = vmatprep.subr.bf16.mxu0 0
        %575 = vmatpush1.bf16.xpose.msra.mxu0 0
        %576 = vmatprep.mubr.bf16.mxu0 0
        %577 = vmatmul.mubr.bf16.gmra.mrb[0].mxu0 %v515
        %v578 = vpop.f32.mrb[0].mxu0
        %v579 = vadd.f32 %v489, %v578
        %v580 = vpop.f32.mrb[0].mxu0
        %v581 = vpop.f32.mrb[0].mxu0
        %v582 = vadd.f32 %v492, %v581
        %v583 = vpop.f32.mrb[0].mxu0
        %584 = vmatprep.mubr.bf16.mxu0 0
        %585 = vmatmul.mubr.bf16.gmra.mrb[0].mxu0 %v518
        %v586 = vpop.f32.mrb[0].mxu0
        %v587 = vadd.f32 %v497, %v586
        %v588 = vpop.f32.mrb[0].mxu0
        %v589 = vpop.f32.mrb[0].mxu0
        %v590 = vadd.f32 %v500, %v589
        %v591 = vpop.f32.mrb[0].mxu0
        %592 = vdwg.mxu0
        %v593 = vld [vmem:[%s4] sm:$0xff]
        %v594 = vld [vmem:[%s4 + $0x8] sm:$0xff]
        %v595 = vld [vmem:[%s4 + $0x10] sm:$0xff]
        %v596 = vld [vmem:[%s4 + $0x18] sm:$0xff]
        %598 = vset.pattern.permute.xlu0 0
        %599 = vperm.xlu0 %598, %v593
        %v600 = vpop.permute.xlu0 %599
        %603 = vset.pattern.permute.xlu0 0
        %604 = vperm.xlu0 %603, %v594
        %v605 = vpop.permute.xlu0 %604
        %608 = vset.pattern.permute.xlu0 0
        %609 = vperm.xlu0 %608, %v595
        %v610 = vpop.permute.xlu0 %609
        %613 = vset.pattern.permute.xlu0 0
        %614 = vperm.xlu0 %613, %v596
        %v615 = vpop.permute.xlu0 %614
        %v617 = vadd.f32 %v579, %v600
        %v618 = vadd.f32 %v582, %v605
        %v619 = vadd.f32 %v587, %v610
        %v620 = vadd.f32 %v590, %v615
        %v621 = vtanh.pop %v617
        %v622 = vtanh.pop %v618
        %v623 = vtanh.pop %v619
        %v624 = vtanh.pop %v620
        %v625 = vld [vmem:[%s5] sm:$0xf]
        %v626 = vld [vmem:[%s5 + $0x4] sm:$0xf]
        %v627 = vld [vmem:[%s5 + $0x8] sm:$0xf]
        %v628 = vld [vmem:[%s5 + $0xc] sm:$0xf]
        %v629 = vpack.c.bf16 %v622, %v621
        %v630 = vpack.c.bf16 %v624, %v623
        %v631 = vld [vmem:[%s6] sm:$0xff]
        %v632 = vld [vmem:[%s6 + $0x8] sm:$0xff]
        %v633 = vld [vmem:[%s6 + $0x10] sm:$0xff]
        %v634 = vld [vmem:[%s6 + $0x18] sm:$0xff]
        %636 = vset.pattern.permute.xlu0 0
        %637 = vperm.xlu0 %636, %v631
        %v638 = vpop.permute.xlu0 %637
        %641 = vset.pattern.permute.xlu0 0
        %642 = vperm.xlu0 %641, %v632
        %v643 = vpop.permute.xlu0 %642
        %646 = vset.pattern.permute.xlu0 0
        %647 = vperm.xlu0 %646, %v633
        %v648 = vpop.permute.xlu0 %647
        %651 = vset.pattern.permute.xlu0 0
        %652 = vperm.xlu0 %651, %v634
        %v653 = vpop.permute.xlu0 %652
        %v659 = vunpack.c.l.b16 %v625
        %v660 = vunpack.c.l.b16 %v626
        %v661 = vunpack.c.l.b16 %v627
        %v662 = vunpack.c.l.b16 %v628
        %v663 = vpack.c.b16 %v660, %v659
        %v664 = vpack.c.b16 %v662, %v661
        %vm665 = vcmask 261120
        %v667 = vsel %vm665, %v663, 0
        %v670 = vsel %vm665, %v664, 0
        %672 = vmatprep.subr.bf16.mxu0 0
        %673 = vmatpush1.bf16.msra.mxu0 %v629
        %674 = vmatprep.subr.bf16.mxu0 0
        %675 = vmatpush1.bf16.msra.mxu0 %v630
        %676 = vmatprep.subr.bf16.mxu0 0
        %677 = vmatpush1.bf16.msra.mxu0 0
        %678 = vmatprep.subr.bf16.mxu0 0
        %679 = vmatpush1.bf16.msra.mxu0 0
        %680 = vmatprep.subr.bf16.mxu0 0
        %681 = vmatpush1.bf16.msra.mxu0 0
        %682 = vmatprep.subr.bf16.mxu0 0
        %683 = vmatpush1.bf16.msra.mxu0 0
        %684 = vmatprep.subr.bf16.mxu0 0
        %685 = vmatpush1.bf16.msra.mxu0 0
        %686 = vmatprep.subr.bf16.mxu0 0
        %687 = vmatpush1.bf16.msra.mxu0 0
        %688 = vmatprep.subr.bf16.mxu0 0
        %689 = vmatpush1.bf16.msra.mxu0 0
        %690 = vmatprep.subr.bf16.mxu0 0
        %691 = vmatpush1.bf16.msra.mxu0 0
        %692 = vmatprep.subr.bf16.mxu0 0
        %693 = vmatpush1.bf16.msra.mxu0 0
        %694 = vmatprep.subr.bf16.mxu0 0
        %695 = vmatpush1.bf16.msra.mxu0 0
        %696 = vmatprep.subr.bf16.mxu0 0
        %697 = vmatpush1.bf16.msra.mxu0 0
        %698 = vmatprep.subr.bf16.mxu0 0
        %699 = vmatpush1.bf16.msra.mxu0 0
        %700 = vmatprep.subr.bf16.mxu0 0
        %701 = vmatpush1.bf16.msra.mxu0 0
        %702 = vmatprep.subr.bf16.mxu0 0
        %703 = vmatpush1.bf16.msra.mxu0 0
        %704 = vmatprep.mubr.bf16.mxu0 0
        %705 = vmatmul.mubr.bf16.gmra.mrb[0].mxu0 %v667
        %v706 = vpop.f32.mrb[0].mxu0
        %v707 = vadd.f32 %v638, %v706
        %v708 = vpop.f32.mrb[0].mxu0
        %v709 = vpop.f32.mrb[0].mxu0
        %v710 = vadd.f32 %v643, %v709
        %v711 = vpop.f32.mrb[0].mxu0
        %712 = vmatprep.mubr.bf16.mxu0 0
        %713 = vmatmul.mubr.bf16.gmra.mrb[0].mxu0 %v670
        %v714 = vpop.f32.mrb[0].mxu0
        %v715 = vadd.f32 %v648, %v714
        %v716 = vpop.f32.mrb[0].mxu0
        %v717 = vpop.f32.mrb[0].mxu0
        %v718 = vadd.f32 %v653, %v717
        %v719 = vpop.f32.mrb[0].mxu0
        %720 = vdwg.mxu0
        %v721 = vtanh.pop %v707
        %v722 = vtanh.pop %v710
        %v723 = vtanh.pop %v715
        %v724 = vtanh.pop %v718
        %v725 = vld [vmem:[%s7] sm:$0xff]
        %v726 = vld [vmem:[%s7 + $0x8] sm:$0xff]
        %v727 = vld [vmem:[%s7 + $0x10] sm:$0xff]
        %v728 = vld [vmem:[%s7 + $0x18] sm:$0xff]
        %730 = vset.pattern.permute.xlu0 0
        %731 = vperm.xlu0 %730, %v725
        %v732 = vpop.permute.xlu0 %731
        %735 = vset.pattern.permute.xlu0 0
        %736 = vperm.xlu0 %735, %v726
        %v737 = vpop.permute.xlu0 %736
        %740 = vset.pattern.permute.xlu0 0
        %741 = vperm.xlu0 %740, %v727
        %v742 = vpop.permute.xlu0 %741
        %745 = vset.pattern.permute.xlu0 0
        %746 = vperm.xlu0 %745, %v728
        %v747 = vpop.permute.xlu0 %746
        %v749 = vmul.f32 %v721, %v732
        %v750 = vmul.f32 %v722, %v737
        %v751 = vmul.f32 %v723, %v742
        %v752 = vmul.f32 %v724, %v747
        %v753 = vadd.f32 %v749, %v750
        %v754 = vadd.f32 %v753, %v751
        %v755 = vadd.f32 %v754, %v752
        %v756 = vrot.slane %v755, 4
        %v757 = vadd.f32 %v755, %v756
        %v758 = vrot.slane %v757, 2
        %v759 = vadd.f32 %v757, %v758
        %v760 = vrot.slane %v759, 1
        %v761 = vadd.f32 %v759, %v760
        %v762 = vld [vmem:[#allocation2] sm:$0x1]
        %764 = vset.pattern.permute.xlu0 0
        %765 = vperm.xlu0 %764, %v762
        %v766 = vpop.permute.xlu0 %765
        %v768 = vlaneseq
        %v769 = vshrl.u32 %v768, 7
        %v770 = vsub.s32 0, %v769
        %v771 = vrot.slane %v766, %v770
        %v772 = vadd.f32 %v761, %v771
        %773 = vst [vmem:[%s343] sm:$0x1] %v772
        %s774 = sand.u32 %s232, 1
        %s775 = scalar_lea.sflag [#allocation4], %s774
        %s776 = sand.u32 %s232, 1
        %s777 = scalar_lea.vmem [#allocation3], %s776
        // Predicated region
        $region57: #{critic_forward.1} parent=55 // pred_check
          %p778 = pneg %p242
        $region58: #{critic_forward.1} parent=55 // pred_check_branch
          %780 = sbr.rel (%p778) target = $region60
        $region59: #{critic_forward.1} parent=55 // pred_region
          %s782 = ssub.s32 16, 16
          %783 = vsyncadd %s775, %s782
          %s784 = smul.addr %s25, 16
          %s785 = scalar_lea.hbm %s9, %s784
          %s787 = sshll.u32 %s777, 4
          %s788 = int_to_ptr.vmem [resolvable:$true] %s787
          %790 = dma.vmem_to_hbm [thread:$0]  %s788, 16, %s785, %s775
        $region60: #{critic_forward.1} parent=55 // pred_fallthru
          _
      $region56: #{critic_forward.1} parent=5 // pred_fallthru
        _
      %p791 = scmp.le.s32.totalorder 2, %s20
      // Predicated region
      $region61: #{critic_forward.1} parent=5 // pred_check
        %p792 = pneg %p791
      $region62: #{critic_forward.1} parent=5 // pred_check_branch
        %794 = sbr.rel (%p792) target = $region64
      $region63: #{critic_forward.1} parent=5 // pred_region
        %s795 = ssub.s32 %s20, 2
        // Predicated region
        $region65: #{critic_forward.1} parent=63 // pred_check
          %p796 = pneg %p248
        $region66: #{critic_forward.1} parent=63 // pred_check_branch
          %798 = sbr.rel (%p796) target = $region68
        $region67: #{critic_forward.1} parent=63 // pred_region
          %s799 = sand.u32 %s233, 1
          %s800 = scalar_lea.sflag [#allocation4], %s799
          %s801 = sand.u32 %s233, 1
          %s802 = scalar_lea.vmem [#allocation3], %s801
          %803 = dma.done %s800, 16
        $region68: #{critic_forward.1} parent=63 // pred_fallthru
          _
      $region64: #{critic_forward.1} parent=5 // pred_fallthru
        _
    $region6: #{critic_forward.1} parent=1 // loop_footer
      %s24 = sadd.s32 1, %s20
    $region7: #{critic_forward.1} parent=1 // loop_footer_branch
      %19 = sbr.rel target = $region3
    $region8: #{critic_forward.1} parent=1 // loop_exit
      _
    %804 = vsyncpa [#allocation4], 1
    %s805 = scalar_lea.sflag [#allocation4], 1
    %806 = vsyncpa %s805, 1

</llo_original>
